<compile_context>
chip_gen: v7x
topology: tpu7x:2x2x1
jax: 0.10.0
libtpu: 0.0.40
codegen_flags: <defaults>
</compile_context>

<pallas_src>
import functools

import jax
import jax.numpy as jnp
from jax.experimental import pallas as pl
from jax.experimental.pallas import tpu as pltpu

LANE = 128
SUBLANE = 8


def _round_up(x, m):
    return (x + m - 1) // m * m


def vae_kernel(x_ref, eps_ref,
               w1_ref, b1_ref, wh_ref, bh_ref, w3_ref, b3_ref, w4_ref, b4_ref,
               out_ref, kl_ref, *, latent_size, latent_pad, n_rows):
    i = pl.program_id(0)
    row_tile = x_ref.shape[0]

    x = x_ref[...].astype(jnp.float32)

    # ---- encode: fc1 + relu ------------------------------------------------
    h1 = jnp.maximum(
        jnp.dot(x, w1_ref[...], preferred_element_type=jnp.float32) + b1_ref[...],
        0.0)

    # ---- fused mu/sigma head (fc21 | fc22 packed into one lane-dense matmul)
    head = jnp.dot(h1, wh_ref[...], preferred_element_type=jnp.float32) + bh_ref[...]
    mu = head[:, :latent_pad]        # 128-aligned slice
    sigma = head[:, latent_pad:]     # 128-aligned slice

    # ---- reparameterize: z = mu + sigma * eps  (eps ~ N(0,1) from host) ----
    z = mu + sigma * eps_ref[...]

    # ---- per-tile KL partial (masked to real rows / real latent lanes) -----
    # kl = 0.5 * sum(sigma^2 + mu^2 - log(sigma^2) - 1)
    lane_ids = jax.lax.broadcasted_iota(jnp.int32, mu.shape, 1)
    row_ids = jax.lax.broadcasted_iota(jnp.int32, mu.shape, 0) + i * row_tile
    valid = (lane_ids < latent_size) & (row_ids < n_rows)
    s2 = sigma * sigma
    s2_safe = jnp.where(valid, s2, 1.0)          # avoid log(0) on padded lanes
    kl_elem = 0.5 * (s2 + mu * mu - jnp.log(s2_safe) - 1.0)
    kl_tile = jnp.sum(jnp.where(valid, kl_elem, 0.0))
    # lane-dense store of the per-tile scalar; wrapper reads [tile, 0, 0]
    kl_ref[...] = jnp.full(kl_ref.shape, kl_tile, jnp.float32)

    # ---- decode: fc3 + relu, fc4 -------------------------------------------
    h3 = jnp.maximum(
        jnp.dot(z, w3_ref[...], preferred_element_type=jnp.float32) + b3_ref[...],
        0.0)
    out_ref[...] = (jnp.dot(h3, w4_ref[...], preferred_element_type=jnp.float32)
                    + b4_ref[...]).astype(out_ref.dtype)


def make_params(key, input_size, latent_size, hidden_size, dtype=jnp.float32):
    """Deterministic synthetic parameters. Weights stored (in, out)."""
    ks = jax.random.split(key, 10)

    def lin(kw, kb, fan_in, fan_out):
        w = jax.random.normal(kw, (fan_in, fan_out), dtype) * 0.1
        b = jax.random.normal(kb, (1, fan_out), dtype) * 0.01
        return w, b

    w1, b1 = lin(ks[0], ks[1], input_size, hidden_size)     # fc1
    w21, b21 = lin(ks[2], ks[3], hidden_size, latent_size)  # fc21 (mu)
    w22, b22 = lin(ks[4], ks[5], hidden_size, latent_size)  # fc22 (sigma)
    w3, b3 = lin(ks[6], ks[7], latent_size, hidden_size)    # fc3
    w4, b4 = lin(ks[8], ks[9], hidden_size, input_size)     # fc4
    return (w1, b1, w21, b21, w22, b22, w3, b3, w4, b4)


def _place(src, shape):
    """Zero-pad `src` into the top-left corner of a zeros array of `shape`."""
    dst = jnp.zeros(shape, src.dtype)
    return dst.at[tuple(slice(0, s) for s in src.shape)].set(src)


def flexible_vae_forward(x, eps, params, *, max_row_tile=512):
    """x: (B, S, input_size) or (rows, input_size); eps: (rows, latent_size).

    max_row_tile: cap on rows processed per grid step (512 keeps the working
    set comfortably inside v7x's 64 MiB VMEM; v5e/v6e could go higher).
    """
    w1, b1, w21, b21, w22, b22, w3, b3, w4, b4 = params

    orig_shape = x.shape
    if x.ndim == 3:
        x2d = x.reshape(-1, x.shape[-1])
    elif x.ndim == 2:
        x2d = x
    else:
        raise ValueError(f"Unsupported rank for x: {x.shape}")

    n_rows, input_size = x2d.shape
    hidden_size = w1.shape[1]
    latent_size = w21.shape[1]

    # Lane-dense padded feature dims.
    dp = _round_up(input_size, LANE)
    hp = _round_up(hidden_size, LANE)
    zp = _round_up(latent_size, LANE)

    # Row tiling: as large as allowed, multiple of 8; ragged tail is masked.
    row_tile = min(_round_up(max_row_tile, SUBLANE), _round_up(n_rows, SUBLANE))
    n_rows_pad = _round_up(n_rows, row_tile)
    num_tiles = n_rows_pad // row_tile

    # Zero-padded inputs / weights (padding is exact: zero rows/cols contribute
    # nothing to the matmuls, padded KL lanes & rows are masked in-kernel).
    x_p = _place(x2d, (n_rows_pad, dp))
    eps_p = _place(eps, (n_rows_pad, zp))
    w1_p = _place(w1, (dp, hp))
    b1_p = _place(b1, (1, hp))
    # Fused mu|sigma head: columns [0:zp) -> mu, [zp:2*zp) -> sigma.
    wh_p = jnp.zeros((hp, 2 * zp), w21.dtype)
    wh_p = wh_p.at[:hidden_size, :latent_size].set(w21)
    wh_p = wh_p.at[:hidden_size, zp:zp + latent_size].set(w22)
    bh_p = jnp.zeros((1, 2 * zp), b21.dtype)
    bh_p = bh_p.at[:, :latent_size].set(b21)
    bh_p = bh_p.at[:, zp:zp + latent_size].set(b22)
    w3_p = _place(w3, (zp, hp))
    b3_p = _place(b3, (1, hp))
    w4_p = _place(w4, (hp, dp))
    b4_p = _place(b4, (1, dp))

    padded_params = (w1_p, b1_p, wh_p, bh_p, w3_p, b3_p, w4_p, b4_p)

    def full_spec(p):
        # whole-array (grid-invariant) block
        return pl.BlockSpec(p.shape, lambda i: (0, 0))

    kernel = functools.partial(
        vae_kernel, latent_size=latent_size, latent_pad=zp, n_rows=n_rows)

    out_p, kl_p = pl.pallas_call(
        kernel,
        out_shape=(
            jax.ShapeDtypeStruct((n_rows_pad, dp), x.dtype),
            jax.ShapeDtypeStruct((num_tiles, SUBLANE, LANE), jnp.float32),
        ),
        grid_spec=pltpu.PrefetchScalarGridSpec(
            num_scalar_prefetch=0,
            grid=(num_tiles,),
            in_specs=[
                pl.BlockSpec((row_tile, dp), lambda i: (i, 0)),   # x rows
                pl.BlockSpec((row_tile, zp), lambda i: (i, 0)),   # eps rows
                *[full_spec(p) for p in padded_params],
            ],
            out_specs=[
                pl.BlockSpec((row_tile, dp), lambda i: (i, 0)),           # decoded
                pl.BlockSpec((1, SUBLANE, LANE), lambda i: (i, 0, 0)),    # kl partials
            ],
        ),
        # Per-tile KL partials -> no cross-step carry -> row axis is parallel
        # (shards across v7x's two TensorCores; harmless on v5e/v6e).
        compiler_params=pltpu.CompilerParams(
            dimension_semantics=("parallel",)),
    )(x_p, eps_p, *padded_params)

    decoded = out_p[:n_rows, :input_size].reshape(orig_shape)
    kl = jnp.sum(kl_p[:, 0, 0])
    return decoded, kl


def reference_forward(x, eps, params):
    """Plain-JAX reference of the same forward pass."""
    w1, b1, w21, b21, w22, b22, w3, b3, w4, b4 = params
    x2d = x.reshape(-1, x.shape[-1])
    h1 = jax.nn.relu(x2d @ w1 + b1)
    mu = h1 @ w21 + b21
    sigma = h1 @ w22 + b22
    z = mu + sigma * eps
    kl = 0.5 * jnp.sum(sigma ** 2 + mu ** 2 - jnp.log(sigma ** 2) - 1.0)
    h3 = jax.nn.relu(z @ w3 + b3)
    out = h3 @ w4 + b4
    return out.reshape(x.shape), kl


if __name__ == "__main__":
    # Small shapes implied by the module: (batch, seq, input_size) input.
    batch, seq = 2, 8
    input_size, latent_size, hidden_size = 16, 8, 32

    key = jax.random.PRNGKey(0)
    k_params, k_x, k_eps = jax.random.split(key, 3)

    params = make_params(k_params, input_size, latent_size, hidden_size)
    x = jax.random.normal(k_x, (batch, seq, input_size), jnp.float32)
    # N(0,1) reparameterization noise (torch draws it internally; passed in
    # explicitly so the kernel is deterministic).
    eps = jax.random.normal(k_eps, (batch * seq, latent_size), jnp.float32)

    decoded, kl = flexible_vae_forward(x, eps, params)
    decoded = jax.block_until_ready(decoded)
    kl = jax.block_until_ready(kl)

    ref_decoded, ref_kl = reference_forward(x, eps, params)
    assert decoded.shape == x.shape
    assert jnp.allclose(decoded, ref_decoded, atol=1e-5, rtol=1e-5)
    assert jnp.allclose(kl, ref_kl, atol=1e-4, rtol=1e-5)

    print("KERNEL_OK")
</pallas_src>

<mosaic_0001>
module attributes {stable_mosaic.version = 11 : i64} {
  func.func @vae_kernel(%arg0: i32, %arg1: memref<16x128xf32, #tpu.memory_space<vmem>>, %arg2: memref<16x128xf32, #tpu.memory_space<vmem>>, %arg3: memref<128x128xf32, #tpu.memory_space<vmem>>, %arg4: memref<1x128xf32, #tpu.memory_space<vmem>>, %arg5: memref<128x256xf32, #tpu.memory_space<vmem>>, %arg6: memref<1x256xf32, #tpu.memory_space<vmem>>, %arg7: memref<128x128xf32, #tpu.memory_space<vmem>>, %arg8: memref<1x128xf32, #tpu.memory_space<vmem>>, %arg9: memref<128x128xf32, #tpu.memory_space<vmem>>, %arg10: memref<1x128xf32, #tpu.memory_space<vmem>>, %arg11: memref<16x128xf32, #tpu.memory_space<vmem>>, %arg12: memref<1x8x128xf32, #tpu.memory_space<vmem>>) attributes {dimension_semantics = [#tpu.dimension_semantics<parallel>], iteration_bounds = array<i64: 1>, scalar_prefetch = 0 : i64, scratch_operands = 0 : i64, tpu.core_type = #tpu.core_type<tc>, window_params = [{transform_indices = @transform_0, window_bounds = array<i64: 16, 128>}, {transform_indices = @transform_1, window_bounds = array<i64: 16, 128>}, {pipeline_mode = #tpu.pipeline_mode<synchronous>, transform_indices = @transform_2, window_bounds = array<i64: 128, 128>}, {pipeline_mode = #tpu.pipeline_mode<synchronous>, transform_indices = @transform_3, window_bounds = array<i64: 1, 128>}, {pipeline_mode = #tpu.pipeline_mode<synchronous>, transform_indices = @transform_4, window_bounds = array<i64: 128, 256>}, {pipeline_mode = #tpu.pipeline_mode<synchronous>, transform_indices = @transform_5, window_bounds = array<i64: 1, 256>}, {pipeline_mode = #tpu.pipeline_mode<synchronous>, transform_indices = @transform_6, window_bounds = array<i64: 128, 128>}, {pipeline_mode = #tpu.pipeline_mode<synchronous>, transform_indices = @transform_7, window_bounds = array<i64: 1, 128>}, {pipeline_mode = #tpu.pipeline_mode<synchronous>, transform_indices = @transform_8, window_bounds = array<i64: 128, 128>}, {pipeline_mode = #tpu.pipeline_mode<synchronous>, transform_indices = @transform_9, window_bounds = array<i64: 1, 128>}, {transform_indices = @transform_10, window_bounds = array<i64: 16, 128>}, {transform_indices = @transform_11, window_bounds = array<i64: 1, 8, 128>}]} {
    %c0 = arith.constant 0 : index
    %c0_0 = arith.constant 0 : index
    %0 = vector.load %arg1[%c0, %c0_0] : memref<16x128xf32, #tpu.memory_space<vmem>>, vector<16x128xf32>
    %c0_1 = arith.constant 0 : index
    %c0_2 = arith.constant 0 : index
    %1 = vector.load %arg3[%c0_1, %c0_2] : memref<128x128xf32, #tpu.memory_space<vmem>>, vector<128x128xf32>
    %cst = arith.constant dense<0.000000e+00> : vector<16x128xf32>
    %2 = tpu.matmul %0, %1, %cst {dimension_numbers = #tpu.dot_dimension_numbers<[1], [0], [0], [1], [0, 0, 1, 1], [], []>} : vector<16x128xf32>, vector<128x128xf32>, vector<16x128xf32> -> vector<16x128xf32>
    %c0_3 = arith.constant 0 : index
    %c0_4 = arith.constant 0 : index
    %3 = vector.load %arg4[%c0_3, %c0_4] : memref<1x128xf32, #tpu.memory_space<vmem>>, vector<1x128xf32>
    %4 = vector.broadcast %3 : vector<1x128xf32> to vector<16x128xf32>
    %5 = arith.addf %2, %4 : vector<16x128xf32>
    %cst_5 = arith.constant 0.000000e+00 : f32
    %6 = vector.broadcast %cst_5 : f32 to vector<16x128xf32>
    %7 = arith.maximumf %5, %6 : vector<16x128xf32>
    %c0_6 = arith.constant 0 : index
    %c0_7 = arith.constant 0 : index
    %8 = vector.load %arg5[%c0_6, %c0_7] : memref<128x256xf32, #tpu.memory_space<vmem>>, vector<128x256xf32>
    %cst_8 = arith.constant dense<0.000000e+00> : vector<16x256xf32>
    %9 = tpu.matmul %7, %8, %cst_8 {dimension_numbers = #tpu.dot_dimension_numbers<[1], [0], [0], [1], [0, 0, 1, 1], [], []>} : vector<16x128xf32>, vector<128x256xf32>, vector<16x256xf32> -> vector<16x256xf32>
    %c0_9 = arith.constant 0 : index
    %c0_10 = arith.constant 0 : index
    %10 = vector.load %arg6[%c0_9, %c0_10] : memref<1x256xf32, #tpu.memory_space<vmem>>, vector<1x256xf32>
    %11 = vector.broadcast %10 : vector<1x256xf32> to vector<16x256xf32>
    %12 = arith.addf %9, %11 : vector<16x256xf32>
    %13 = vector.extract_strided_slice %12 {offsets = [0, 0], sizes = [16, 128], strides = [1, 1]} : vector<16x256xf32> to vector<16x128xf32>
    %14 = vector.extract_strided_slice %12 {offsets = [0, 128], sizes = [16, 128], strides = [1, 1]} : vector<16x256xf32> to vector<16x128xf32>
    %c0_11 = arith.constant 0 : index
    %c0_12 = arith.constant 0 : index
    %15 = vector.load %arg2[%c0_11, %c0_12] : memref<16x128xf32, #tpu.memory_space<vmem>>, vector<16x128xf32>
    %16 = arith.mulf %14, %15 : vector<16x128xf32>
    %17 = arith.addf %13, %16 : vector<16x128xf32>
    %18 = tpu.iota {dimensions = array<i32: 1>} : vector<16x128xi32>
    %19 = tpu.iota {dimensions = array<i32: 0>} : vector<16x128xi32>
    %c16_i32 = arith.constant 16 : i32
    %20 = arith.muli %arg0, %c16_i32 : i32
    %21 = vector.broadcast %20 : i32 to vector<16x128xi32>
    %22 = arith.addi %19, %21 : vector<16x128xi32>
    %c8_i32 = arith.constant 8 : i32
    %23 = vector.broadcast %c8_i32 : i32 to vector<16x128xi32>
    %24 = arith.cmpi slt, %18, %23 : vector<16x128xi32>
    %c16_i32_13 = arith.constant 16 : i32
    %25 = vector.broadcast %c16_i32_13 : i32 to vector<16x128xi32>
    %26 = arith.cmpi slt, %22, %25 : vector<16x128xi32>
    %27 = arith.andi %24, %26 : vector<16x128xi1>
    %28 = arith.mulf %14, %14 : vector<16x128xf32>
    %cst_14 = arith.constant 1.000000e+00 : f32
    %29 = vector.broadcast %cst_14 : f32 to vector<16x128xf32>
    %30 = arith.select %27, %28, %29 : vector<16x128xi1>, vector<16x128xf32>
    %31 = arith.mulf %13, %13 : vector<16x128xf32>
    %32 = arith.addf %28, %31 : vector<16x128xf32>
    %33 = math.log %30 : vector<16x128xf32>
    %34 = arith.subf %32, %33 : vector<16x128xf32>
    %cst_15 = arith.constant 1.000000e+00 : f32
    %35 = vector.broadcast %cst_15 : f32 to vector<16x128xf32>
    %36 = arith.subf %34, %35 : vector<16x128xf32>
    %cst_16 = arith.constant 5.000000e-01 : f32
    %37 = vector.broadcast %cst_16 : f32 to vector<16x128xf32>
    %38 = arith.mulf %37, %36 : vector<16x128xf32>
    %cst_17 = arith.constant 0.000000e+00 : f32
    %39 = vector.broadcast %cst_17 : f32 to vector<16x128xf32>
    %40 = arith.select %27, %38, %39 : vector<16x128xi1>, vector<16x128xf32>
    %41 = vector.shape_cast %40 : vector<16x128xf32> to vector<1x16x128xf32>
    %cst_18 = arith.constant dense<0.000000e+00> : vector<1xf32>
    %42 = vector.multi_reduction <add>, %41, %cst_18 [1, 2] : vector<1x16x128xf32> to vector<1xf32>
    %43 = vector.shape_cast %42 : vector<1xf32> to vector<1x1x1xf32>
    %44 = vector.extract %43[0, 0, 0] : f32 from vector<1x1x1xf32>
    %45 = vector.broadcast %44 : f32 to vector<1x8x128xf32>
    %c0_19 = arith.constant 0 : index
    %c0_20 = arith.constant 0 : index
    %c0_21 = arith.constant 0 : index
    %46 = vector.load %arg12[%c0_19, %c0_20, %c0_21] : memref<1x8x128xf32, #tpu.memory_space<vmem>>, vector<1x8x128xf32>
    tpu.vector_store %arg12[%c0_19, %c0_20, %c0_21], %45 {strides = array<i32>} : memref<1x8x128xf32, #tpu.memory_space<vmem>>, vector<1x8x128xf32>,
    %c0_22 = arith.constant 0 : index
    %c0_23 = arith.constant 0 : index
    %47 = vector.load %arg7[%c0_22, %c0_23] : memref<128x128xf32, #tpu.memory_space<vmem>>, vector<128x128xf32>
    %cst_24 = arith.constant dense<0.000000e+00> : vector<16x128xf32>
    %48 = tpu.matmul %17, %47, %cst_24 {dimension_numbers = #tpu.dot_dimension_numbers<[1], [0], [0], [1], [0, 0, 1, 1], [], []>} : vector<16x128xf32>, vector<128x128xf32>, vector<16x128xf32> -> vector<16x128xf32>
    %c0_25 = arith.constant 0 : index
    %c0_26 = arith.constant 0 : index
    %49 = vector.load %arg8[%c0_25, %c0_26] : memref<1x128xf32, #tpu.memory_space<vmem>>, vector<1x128xf32>
    %50 = vector.broadcast %49 : vector<1x128xf32> to vector<16x128xf32>
    %51 = arith.addf %48, %50 : vector<16x128xf32>
    %cst_27 = arith.constant 0.000000e+00 : f32
    %52 = vector.broadcast %cst_27 : f32 to vector<16x128xf32>
    %53 = arith.maximumf %51, %52 : vector<16x128xf32>
    %c0_28 = arith.constant 0 : index
    %c0_29 = arith.constant 0 : index
    %54 = vector.load %arg9[%c0_28, %c0_29] : memref<128x128xf32, #tpu.memory_space<vmem>>, vector<128x128xf32>
    %cst_30 = arith.constant dense<0.000000e+00> : vector<16x128xf32>
    %55 = tpu.matmul %53, %54, %cst_30 {dimension_numbers = #tpu.dot_dimension_numbers<[1], [0], [0], [1], [0, 0, 1, 1], [], []>} : vector<16x128xf32>, vector<128x128xf32>, vector<16x128xf32> -> vector<16x128xf32>
    %c0_31 = arith.constant 0 : index
    %c0_32 = arith.constant 0 : index
    %56 = vector.load %arg10[%c0_31, %c0_32] : memref<1x128xf32, #tpu.memory_space<vmem>>, vector<1x128xf32>
    %57 = vector.broadcast %56 : vector<1x128xf32> to vector<16x128xf32>
    %58 = arith.addf %55, %57 : vector<16x128xf32>
    %c0_33 = arith.constant 0 : index
    %c0_34 = arith.constant 0 : index
    %59 = vector.load %arg11[%c0_33, %c0_34] : memref<16x128xf32, #tpu.memory_space<vmem>>, vector<16x128xf32>
    tpu.vector_store %arg11[%c0_33, %c0_34], %58 {strides = array<i32>} : memref<16x128xf32, #tpu.memory_space<vmem>>, vector<16x128xf32>,
    return
  }
  func.func @transform_0(%arg0: i32) -> (i32, i32) {
    %c0_i32 = arith.constant 0 : i32
    %c0_i32_0 = arith.constant 0 : i32
    return %arg0, %c0_i32 : i32, i32
  }
  func.func @transform_1(%arg0: i32) -> (i32, i32) {
    %c0_i32 = arith.constant 0 : i32
    %c0_i32_0 = arith.constant 0 : i32
    return %arg0, %c0_i32 : i32, i32
  }
  func.func @transform_2(%arg0: i32) -> (i32, i32) {
    %c0_i32 = arith.constant 0 : i32
    %c0_i32_0 = arith.constant 0 : i32
    %c0_i32_1 = arith.constant 0 : i32
    return %c0_i32, %c0_i32_0 : i32, i32
  }
  func.func @transform_3(%arg0: i32) -> (i32, i32) {
    %c0_i32 = arith.constant 0 : i32
    %c0_i32_0 = arith.constant 0 : i32
    %c0_i32_1 = arith.constant 0 : i32
    return %c0_i32, %c0_i32_0 : i32, i32
  }
  func.func @transform_4(%arg0: i32) -> (i32, i32) {
    %c0_i32 = arith.constant 0 : i32
    %c0_i32_0 = arith.constant 0 : i32
    %c0_i32_1 = arith.constant 0 : i32
    return %c0_i32, %c0_i32_0 : i32, i32
  }
  func.func @transform_5(%arg0: i32) -> (i32, i32) {
    %c0_i32 = arith.constant 0 : i32
    %c0_i32_0 = arith.constant 0 : i32
    %c0_i32_1 = arith.constant 0 : i32
    return %c0_i32, %c0_i32_0 : i32, i32
  }
  func.func @transform_6(%arg0: i32) -> (i32, i32) {
    %c0_i32 = arith.constant 0 : i32
    %c0_i32_0 = arith.constant 0 : i32
    %c0_i32_1 = arith.constant 0 : i32
    return %c0_i32, %c0_i32_0 : i32, i32
  }
  func.func @transform_7(%arg0: i32) -> (i32, i32) {
    %c0_i32 = arith.constant 0 : i32
    %c0_i32_0 = arith.constant 0 : i32
    %c0_i32_1 = arith.constant 0 : i32
    return %c0_i32, %c0_i32_0 : i32, i32
  }
  func.func @transform_8(%arg0: i32) -> (i32, i32) {
    %c0_i32 = arith.constant 0 : i32
    %c0_i32_0 = arith.constant 0 : i32
    %c0_i32_1 = arith.constant 0 : i32
    return %c0_i32, %c0_i32_0 : i32, i32
  }
  func.func @transform_9(%arg0: i32) -> (i32, i32) {
    %c0_i32 = arith.constant 0 : i32
    %c0_i32_0 = arith.constant 0 : i32
    %c0_i32_1 = arith.constant 0 : i32
    return %c0_i32, %c0_i32_0 : i32, i32
  }
  func.func @transform_10(%arg0: i32) -> (i32, i32) {
    %c0_i32 = arith.constant 0 : i32
    %c0_i32_0 = arith.constant 0 : i32
    return %arg0, %c0_i32 : i32, i32
  }
  func.func @transform_11(%arg0: i32) -> (i32, i32, i32) {
    %c0_i32 = arith.constant 0 : i32
    %c0_i32_0 = arith.constant 0 : i32
    %c0_i32_1 = arith.constant 0 : i32
    return %arg0, %c0_i32, %c0_i32_0 : i32, i32, i32
  }
}

</mosaic_0001>

<llo_original>
// kernel: tpu_custom_call.1
$region0: #{tpu_custom_call.1}
  #allocation0 [shape = 'u32[]', space=smem, size = 0x4, offset = 0x4, fixed_abs, tag = 'smem constant byte address 0x4 - core index']
  #allocation1 [shape = 'u32[144,128]{1,0:T(1,128)}', space=vmem, size = 0x12000, scoped, tag = 'internal scratch']
  %s0 = inlined_call_operand.hbm [shape: f32[16,128], index: 0, kind: input, shape index: {}]
  %s1 = inlined_call_operand.hbm [shape: f32[16,128], index: 1, kind: input, shape index: {}]
  %s2 = inlined_call_operand.hbm [shape: f32[128,128], index: 2, kind: input, shape index: {}]
  %s3 = inlined_call_operand.vmem [shape: f32[1,128], index: 3, kind: input, shape index: {}]
  %s4 = inlined_call_operand.hbm [shape: f32[128,256], index: 4, kind: input, shape index: {}]
  %s5 = inlined_call_operand.vmem [shape: f32[1,256], index: 5, kind: input, shape index: {}]
  %s6 = inlined_call_operand.hbm [shape: f32[128,128], index: 6, kind: input, shape index: {}]
  %s7 = inlined_call_operand.vmem [shape: f32[1,128], index: 7, kind: input, shape index: {}]
  %s8 = inlined_call_operand.hbm [shape: f32[128,128], index: 8, kind: input, shape index: {}]
  %s9 = inlined_call_operand.vmem [shape: f32[1,128], index: 9, kind: input, shape index: {}]
  %s10 = inlined_call_operand.hbm [shape: f32[16,128], index: 10, kind: output, shape index: {0}]
  %s11 = inlined_call_operand.hbm [shape: f32[1,8,128], index: 11, kind: output, shape index: {1}]
  %12 = xla_tuple %s10, %s11
  %s13 = sld [smem:[#allocation0]]
  $region82: #{tpu_custom_call.1} parent=0
    _
  %s15 = ssub.s32 1, %s13
  %s16 = scalar_select 0, %s15, %s13
  $region1: #{tpu_custom_call.1} parent=0
    #allocation2 [shape = 'u8[8192]{0}', space=vmem, size = 0x2000, scoped, tag = 'input window, operand 0, single buffered']
    #allocation3 [shape = 's32[1]{0}', space=sflag, size = 0x4, scoped, tag = 'scoped memory for tpu_custom_call.1']
    #allocation4 [shape = 's32[1]{0}', space=sflag, size = 0x4, scoped, tag = 'scoped memory for tpu_custom_call.1']
    #allocation5 [shape = 'u8[8192]{0}', space=vmem, size = 0x2000, scoped, tag = 'input window, operand 1, single buffered']
    #allocation6 [shape = 's32[1]{0}', space=sflag, size = 0x4, scoped, tag = 'scoped memory for tpu_custom_call.1']
    #allocation7 [shape = 'u8[65536]{0}', space=vmem, size = 0x10000, scoped, tag = 'input window, operand 2, single buffered']
    #allocation8 [shape = 'u8[131072]{0}', space=vmem, size = 0x20000, scoped, tag = 'input window, operand 4, single buffered']
    #allocation9 [shape = 's32[1]{0}', space=sflag, size = 0x4, scoped, tag = 'scoped memory for tpu_custom_call.1']
    #allocation10 [shape = 'u8[65536]{0}', space=vmem, size = 0x10000, scoped, tag = 'input window, operand 6, single buffered']
    #allocation11 [shape = 'u8[65536]{0}', space=vmem, size = 0x10000, scoped, tag = 'input window, operand 8, single buffered']
    #allocation12 [shape = 's32[1]{0}', space=sflag, size = 0x4, scoped, tag = 'scoped memory for tpu_custom_call.1']
    #allocation13 [shape = 'u8[8192]{0}', space=vmem, size = 0x2000, scoped, tag = 'output window, operand 0, single buffered']
    #allocation14 [shape = 'u8[4096]{0}', space=vmem, size = 0x1000, scoped, tag = 'output window, operand 1, single buffered']
    #allocation15 [shape = 's32[1]{0}', space=sflag, size = 0x4, scoped, tag = 'scoped memory for tpu_custom_call.1']
    %17 = vsyncpa [#allocation3], 0
    %18 = vsyncpa [#allocation6], 0
    %19 = vsyncpa [#allocation9], 0
    %20 = vsyncpa [#allocation12], 0
    %21 = vsyncpa [#allocation4], 0
    %22 = vsyncpa [#allocation15], 0
    // Predicated region
    $region2: #{tpu_custom_call.1} parent=1 // pred_check
      _
    $region3: #{tpu_custom_call.1} parent=1 // pred_check_branch
      %24 = sbr.rel (0) target = $region5
    $region4: #{tpu_custom_call.1} parent=1 // pred_region
      %s26 = ssub.s32 256, 256
      %27 = vsyncadd [#allocation3], %s26
      %s28 = sshll.u32 [#allocation2], 4
      %s29 = int_to_ptr.vmem [resolvable:$true] %s28
      %34 = dma.hbm_to_vmem [thread:$0]  %s0, 256, %s29, [#allocation3], 128, 128, 8
    $region5: #{tpu_custom_call.1} parent=1 // pred_fallthru
      _
    // Predicated region
    $region6: #{tpu_custom_call.1} parent=1 // pred_check
      _
    $region7: #{tpu_custom_call.1} parent=1 // pred_check_branch
      %36 = sbr.rel (0) target = $region9
    $region8: #{tpu_custom_call.1} parent=1 // pred_region
      %s38 = ssub.s32 256, 256
      %39 = vsyncadd [#allocation6], %s38
      %s40 = sshll.u32 [#allocation5], 4
      %s41 = int_to_ptr.vmem [resolvable:$true] %s40
      %46 = dma.hbm_to_vmem [thread:$0]  %s1, 256, %s41, [#allocation6], 128, 128, 8
    $region9: #{tpu_custom_call.1} parent=1 // pred_fallthru
      _
    // Predicated region
    $region10: #{tpu_custom_call.1} parent=1 // pred_check
      _
    $region11: #{tpu_custom_call.1} parent=1 // pred_check_branch
      %48 = sbr.rel (0) target = $region13
    $region12: #{tpu_custom_call.1} parent=1 // pred_region
      %s50 = ssub.s32 2048, 2048
      %51 = vsyncadd [#allocation6], %s50
      %s52 = sshll.u32 [#allocation7], 4
      %s53 = int_to_ptr.vmem [resolvable:$true] %s52
      %58 = dma.hbm_to_vmem [thread:$0]  %s2, 2048, %s53, [#allocation6], 128, 128, 8
    $region13: #{tpu_custom_call.1} parent=1 // pred_fallthru
      _
    // Predicated region
    $region14: #{tpu_custom_call.1} parent=1 // pred_check
      _
    $region15: #{tpu_custom_call.1} parent=1 // pred_check_branch
      %60 = sbr.rel (0) target = $region17
    $region16: #{tpu_custom_call.1} parent=1 // pred_region
      _
    $region17: #{tpu_custom_call.1} parent=1 // pred_fallthru
      _
    // Predicated region
    $region18: #{tpu_custom_call.1} parent=1 // pred_check
      _
    $region19: #{tpu_custom_call.1} parent=1 // pred_check_branch
      %62 = sbr.rel (0) target = $region21
    $region20: #{tpu_custom_call.1} parent=1 // pred_region
      %s64 = ssub.s32 4096, 4096
      %65 = vsyncadd [#allocation9], %s64
      %s66 = sshll.u32 [#allocation8], 4
      %s67 = int_to_ptr.vmem [resolvable:$true] %s66
      %72 = dma.hbm_to_vmem [thread:$0]  %s4, 4096, %s67, [#allocation9], 256, 256, 16
    $region21: #{tpu_custom_call.1} parent=1 // pred_fallthru
      _
    // Predicated region
    $region22: #{tpu_custom_call.1} parent=1 // pred_check
      _
    $region23: #{tpu_custom_call.1} parent=1 // pred_check_branch
      %74 = sbr.rel (0) target = $region25
    $region24: #{tpu_custom_call.1} parent=1 // pred_region
      _
    $region25: #{tpu_custom_call.1} parent=1 // pred_fallthru
      _
    // Predicated region
    $region26: #{tpu_custom_call.1} parent=1 // pred_check
      _
    $region27: #{tpu_custom_call.1} parent=1 // pred_check_branch
      %76 = sbr.rel (0) target = $region29
    $region28: #{tpu_custom_call.1} parent=1 // pred_region
      %s78 = ssub.s32 2048, 2048
      %79 = vsyncadd [#allocation9], %s78
      %s80 = sshll.u32 [#allocation10], 4
      %s81 = int_to_ptr.vmem [resolvable:$true] %s80
      %86 = dma.hbm_to_vmem [thread:$0]  %s6, 2048, %s81, [#allocation9], 128, 128, 8
    $region29: #{tpu_custom_call.1} parent=1 // pred_fallthru
      _
    // Predicated region
    $region30: #{tpu_custom_call.1} parent=1 // pred_check
      _
    $region31: #{tpu_custom_call.1} parent=1 // pred_check_branch
      %88 = sbr.rel (0) target = $region33
    $region32: #{tpu_custom_call.1} parent=1 // pred_region
      _
    $region33: #{tpu_custom_call.1} parent=1 // pred_fallthru
      _
    // Predicated region
    $region34: #{tpu_custom_call.1} parent=1 // pred_check
      _
    $region35: #{tpu_custom_call.1} parent=1 // pred_check_branch
      %90 = sbr.rel (0) target = $region37
    $region36: #{tpu_custom_call.1} parent=1 // pred_region
      %s92 = ssub.s32 2048, 2048
      %93 = vsyncadd [#allocation12], %s92
      %s94 = sshll.u32 [#allocation11], 4
      %s95 = int_to_ptr.vmem [resolvable:$true] %s94
      %100 = dma.hbm_to_vmem [thread:$0]  %s8, 2048, %s95, [#allocation12], 128, 128, 8
    $region37: #{tpu_custom_call.1} parent=1 // pred_fallthru
      _
    // Predicated region
    $region38: #{tpu_custom_call.1} parent=1 // pred_check
      _
    $region39: #{tpu_custom_call.1} parent=1 // pred_check_branch
      %102 = sbr.rel (0) target = $region41
    $region40: #{tpu_custom_call.1} parent=1 // pred_region
      _
    $region41: #{tpu_custom_call.1} parent=1 // pred_fallthru
      _
    // Predicated region
    $region42: #{tpu_custom_call.1} parent=1 // pred_check
      _
    $region43: #{tpu_custom_call.1} parent=1 // pred_check_branch
      %104 = sbr.rel (0) target = $region45
    $region44: #{tpu_custom_call.1} parent=1 // pred_region
      %105 = dma.done [#allocation3], 256
    $region45: #{tpu_custom_call.1} parent=1 // pred_fallthru
      _
    // Predicated region
    $region46: #{tpu_custom_call.1} parent=1 // pred_check
      _
    $region47: #{tpu_custom_call.1} parent=1 // pred_check_branch
      %107 = sbr.rel (0) target = $region49
    $region48: #{tpu_custom_call.1} parent=1 // pred_region
      %108 = dma.done [#allocation6], 256
    $region49: #{tpu_custom_call.1} parent=1 // pred_fallthru
      _
    // Predicated region
    $region50: #{tpu_custom_call.1} parent=1 // pred_check
      _
    $region51: #{tpu_custom_call.1} parent=1 // pred_check_branch
      %110 = sbr.rel (0) target = $region53
    $region52: #{tpu_custom_call.1} parent=1 // pred_region
      %111 = dma.done [#allocation6], 2048
    $region53: #{tpu_custom_call.1} parent=1 // pred_fallthru
      _
    // Predicated region
    $region54: #{tpu_custom_call.1} parent=1 // pred_check
      _
    $region55: #{tpu_custom_call.1} parent=1 // pred_check_branch
      %113 = sbr.rel (0) target = $region57
    $region56: #{tpu_custom_call.1} parent=1 // pred_region
      %114 = dma.done [#allocation9], 4096
    $region57: #{tpu_custom_call.1} parent=1 // pred_fallthru
      _
    // Predicated region
    $region58: #{tpu_custom_call.1} parent=1 // pred_check
      _
    $region59: #{tpu_custom_call.1} parent=1 // pred_check_branch
      %116 = sbr.rel (0) target = $region61
    $region60: #{tpu_custom_call.1} parent=1 // pred_region
      %117 = dma.done [#allocation9], 2048
    $region61: #{tpu_custom_call.1} parent=1 // pred_fallthru
      _
    // Predicated region
    $region62: #{tpu_custom_call.1} parent=1 // pred_check
      _
    $region63: #{tpu_custom_call.1} parent=1 // pred_check_branch
      %119 = sbr.rel (0) target = $region65
    $region64: #{tpu_custom_call.1} parent=1 // pred_region
      %120 = dma.done [#allocation12], 2048
    $region65: #{tpu_custom_call.1} parent=1 // pred_fallthru
      _
    %v121 = vld [vmem:[#allocation2] sm:$0xff]
    %v122 = vld [vmem:[#allocation2 + $0x8] sm:$0xff]
    %v123 = vld [vmem:[#allocation7] sm:$0xff]
    %v124 = vld [vmem:[#allocation7 + $0x8] sm:$0xff]
    %v125 = vld [vmem:[#allocation7 + $0x10] sm:$0xff]
    %v126 = vld [vmem:[#allocation7 + $0x18] sm:$0xff]
    %v127 = vld [vmem:[#allocation7 + $0x20] sm:$0xff]
    %v128 = vld [vmem:[#allocation7 + $0x28] sm:$0xff]
    %v129 = vld [vmem:[#allocation7 + $0x30] sm:$0xff]
    %v130 = vld [vmem:[#allocation7 + $0x38] sm:$0xff]
    %v131 = vld [vmem:[#allocation7 + $0x40] sm:$0xff]
    %v132 = vld [vmem:[#allocation7 + $0x48] sm:$0xff]
    %v133 = vld [vmem:[#allocation7 + $0x50] sm:$0xff]
    %v134 = vld [vmem:[#allocation7 + $0x58] sm:$0xff]
    %v135 = vld [vmem:[#allocation7 + $0x60] sm:$0xff]
    %v136 = vld [vmem:[#allocation7 + $0x68] sm:$0xff]
    %v137 = vld [vmem:[#allocation7 + $0x70] sm:$0xff]
    %v138 = vld [vmem:[#allocation7 + $0x78] sm:$0xff]
    %v139 = vld [vmem:[%s3] sm:$0x1]
    %v141 = vlaneseq
    %v142 = vshrl.u32 %v141, 7
    %v143 = vsub.s32 0, %v142
    %v144 = vrot.slane %v139, %v143
    %146 = vmatprep.subr.mxu0 0.0
    %147 = vmatpush1.msra.mxu0 %v123
    %148 = vmatprep.subr.mxu0 0.0
    %149 = vmatpush1.msra.mxu0 %v124
    %150 = vmatprep.subr.mxu0 0.0
    %151 = vmatpush1.msra.mxu0 %v125
    %152 = vmatprep.subr.mxu0 0.0
    %153 = vmatpush1.msra.mxu0 %v126
    %154 = vmatprep.subr.mxu0 0.0
    %155 = vmatpush1.msra.mxu0 %v127
    %156 = vmatprep.subr.mxu0 0.0
    %157 = vmatpush1.msra.mxu0 %v128
    %158 = vmatprep.subr.mxu0 0.0
    %159 = vmatpush1.msra.mxu0 %v129
    %160 = vmatprep.subr.mxu0 0.0
    %161 = vmatpush1.msra.mxu0 %v130
    %162 = vmatprep.subr.mxu0 0.0
    %163 = vmatpush1.msra.mxu0 %v131
    %164 = vmatprep.subr.mxu0 0.0
    %165 = vmatpush1.msra.mxu0 %v132
    %166 = vmatprep.subr.mxu0 0.0
    %167 = vmatpush1.msra.mxu0 %v133
    %168 = vmatprep.subr.mxu0 0.0
    %169 = vmatpush1.msra.mxu0 %v134
    %170 = vmatprep.subr.mxu0 0.0
    %171 = vmatpush1.msra.mxu0 %v135
    %172 = vmatprep.subr.mxu0 0.0
    %173 = vmatpush1.msra.mxu0 %v136
    %174 = vmatprep.subr.mxu0 0.0
    %175 = vmatpush1.msra.mxu0 %v137
    %176 = vmatprep.subr.mxu0 0.0
    %177 = vmatpush1.msra.mxu0 %v138
    %178 = vmatprep.subr.mxu0 0.0
    %179 = vmatpush1.msra.mxu0 0.0
    %180 = vmatprep.subr.mxu0 0.0
    %181 = vmatpush1.msra.mxu0 0.0
    %182 = vmatprep.subr.mxu0 0.0
    %183 = vmatpush1.msra.mxu0 0.0
    %184 = vmatprep.subr.mxu0 0.0
    %185 = vmatpush1.msra.mxu0 0.0
    %186 = vmatprep.subr.mxu0 0.0
    %187 = vmatpush1.msra.mxu0 0.0
    %188 = vmatprep.subr.mxu0 0.0
    %189 = vmatpush1.msra.mxu0 0.0
    %190 = vmatprep.subr.mxu0 0.0
    %191 = vmatpush1.msra.mxu0 0.0
    %192 = vmatprep.subr.mxu0 0.0
    %193 = vmatpush1.msra.mxu0 0.0
    %194 = vmatprep.subr.mxu0 0.0
    %195 = vmatpush1.msra.mxu0 0.0
    %196 = vmatprep.subr.mxu0 0.0
    %197 = vmatpush1.msra.mxu0 0.0
    %198 = vmatprep.subr.mxu0 0.0
    %199 = vmatpush1.msra.mxu0 0.0
    %200 = vmatprep.subr.mxu0 0.0
    %201 = vmatpush1.msra.mxu0 0.0
    %202 = vmatprep.subr.mxu0 0.0
    %203 = vmatpush1.msra.mxu0 0.0
    %204 = vmatprep.subr.mxu0 0.0
    %205 = vmatpush1.msra.mxu0 0.0
    %206 = vmatprep.subr.mxu0 0.0
    %207 = vmatpush1.msra.mxu0 0.0
    %208 = vmatprep.subr.mxu0 0.0
    %209 = vmatpush1.msra.mxu0 0.0
    %210 = vmatprep.mubr.f32.mxu0 0.0
    %211 = vmatmul.mubr.f32.gmra.mrb[0].mxu0 %v121
    %v212 = vpop.f32.mrb[0].mxu0
    %v213 = vadd.f32 %v144, %v212
    %v214 = vpop.f32.mrb[0].mxu0
    %215 = vmatprep.mubr.f32.mxu0 0.0
    %216 = vmatmul.mubr.f32.gmra.mrb[0].mxu0 %v122
    %v217 = vpop.f32.mrb[0].mxu0
    %v218 = vadd.f32 %v144, %v217
    %v219 = vpop.f32.mrb[0].mxu0
    %220 = vdwg.mxu0
    %v221 = vmax.f32 %v213, 0.0
    %v222 = vmax.f32 %v218, 0.0
    %v223 = vld [vmem:[#allocation8] sm:$0xff]
    %v224 = vld [vmem:[#allocation8 + $0x8] sm:$0xff]
    %v225 = vld [vmem:[#allocation8 + $0x10] sm:$0xff]
    %v226 = vld [vmem:[#allocation8 + $0x18] sm:$0xff]
    %v227 = vld [vmem:[#allocation8 + $0x20] sm:$0xff]
    %v228 = vld [vmem:[#allocation8 + $0x28] sm:$0xff]
    %v229 = vld [vmem:[#allocation8 + $0x30] sm:$0xff]
    %v230 = vld [vmem:[#allocation8 + $0x38] sm:$0xff]
    %v231 = vld [vmem:[#allocation8 + $0x40] sm:$0xff]
    %v232 = vld [vmem:[#allocation8 + $0x48] sm:$0xff]
    %v233 = vld [vmem:[#allocation8 + $0x50] sm:$0xff]
    %v234 = vld [vmem:[#allocation8 + $0x58] sm:$0xff]
    %v235 = vld [vmem:[#allocation8 + $0x60] sm:$0xff]
    %v236 = vld [vmem:[#allocation8 + $0x68] sm:$0xff]
    %v237 = vld [vmem:[#allocation8 + $0x70] sm:$0xff]
    %v238 = vld [vmem:[#allocation8 + $0x78] sm:$0xff]
    %v239 = vld [vmem:[#allocation8 + $0x80] sm:$0xff]
    %v240 = vld [vmem:[#allocation8 + $0x88] sm:$0xff]
    %v241 = vld [vmem:[#allocation8 + $0x90] sm:$0xff]
    %v242 = vld [vmem:[#allocation8 + $0x98] sm:$0xff]
    %v243 = vld [vmem:[#allocation8 + $0xa0] sm:$0xff]
    %v244 = vld [vmem:[#allocation8 + $0xa8] sm:$0xff]
    %v245 = vld [vmem:[#allocation8 + $0xb0] sm:$0xff]
    %v246 = vld [vmem:[#allocation8 + $0xb8] sm:$0xff]
    %v247 = vld [vmem:[#allocation8 + $0xc0] sm:$0xff]
    %v248 = vld [vmem:[#allocation8 + $0xc8] sm:$0xff]
    %v249 = vld [vmem:[#allocation8 + $0xd0] sm:$0xff]
    %v250 = vld [vmem:[#allocation8 + $0xd8] sm:$0xff]
    %v251 = vld [vmem:[#allocation8 + $0xe0] sm:$0xff]
    %v252 = vld [vmem:[#allocation8 + $0xe8] sm:$0xff]
    %v253 = vld [vmem:[#allocation8 + $0xf0] sm:$0xff]
    %v254 = vld [vmem:[#allocation8 + $0xf8] sm:$0xff]
    %v255 = vld [vmem:[%s5] sm:$0x3]
    %v257 = vlaneseq
    %v258 = vshrl.u32 %v257, 7
    %v259 = vsub.s32 0, %v258
    %v260 = vrot.slane %v255, %v259
    %v261 = vlaneseq
    %v262 = vshrl.u32 %v261, 7
    %v263 = vsub.s32 1, %v262
    %v264 = vrot.slane %v255, %v263
    %267 = vmatprep.subr.mxu0 %v224
    %268 = vmatpush1.msra.mxu0 %v223
    %269 = vmatprep.subr.mxu0 %v226
    %270 = vmatpush1.msra.mxu0 %v225
    %271 = vmatprep.subr.mxu0 %v228
    %272 = vmatpush1.msra.mxu0 %v227
    %273 = vmatprep.subr.mxu0 %v230
    %274 = vmatpush1.msra.mxu0 %v229
    %275 = vmatprep.subr.mxu0 %v232
    %276 = vmatpush1.msra.mxu0 %v231
    %277 = vmatprep.subr.mxu0 %v234
    %278 = vmatpush1.msra.mxu0 %v233
    %279 = vmatprep.subr.mxu0 %v236
    %280 = vmatpush1.msra.mxu0 %v235
    %281 = vmatprep.subr.mxu0 %v238
    %282 = vmatpush1.msra.mxu0 %v237
    %283 = vmatprep.subr.mxu0 %v240
    %284 = vmatpush1.msra.mxu0 %v239
    %285 = vmatprep.subr.mxu0 %v242
    %286 = vmatpush1.msra.mxu0 %v241
    %287 = vmatprep.subr.mxu0 %v244
    %288 = vmatpush1.msra.mxu0 %v243
    %289 = vmatprep.subr.mxu0 %v246
    %290 = vmatpush1.msra.mxu0 %v245
    %291 = vmatprep.subr.mxu0 %v248
    %292 = vmatpush1.msra.mxu0 %v247
    %293 = vmatprep.subr.mxu0 %v250
    %294 = vmatpush1.msra.mxu0 %v249
    %295 = vmatprep.subr.mxu0 %v252
    %296 = vmatpush1.msra.mxu0 %v251
    %297 = vmatprep.subr.mxu0 %v254
    %298 = vmatpush1.msra.mxu0 %v253
    %299 = vmatprep.subr.mxu0 0.0
    %300 = vmatpush1.msra.mxu0 0.0
    %301 = vmatprep.subr.mxu0 0.0
    %302 = vmatpush1.msra.mxu0 0.0
    %303 = vmatprep.subr.mxu0 0.0
    %304 = vmatpush1.msra.mxu0 0.0
    %305 = vmatprep.subr.mxu0 0.0
    %306 = vmatpush1.msra.mxu0 0.0
    %307 = vmatprep.subr.mxu0 0.0
    %308 = vmatpush1.msra.mxu0 0.0
    %309 = vmatprep.subr.mxu0 0.0
    %310 = vmatpush1.msra.mxu0 0.0
    %311 = vmatprep.subr.mxu0 0.0
    %312 = vmatpush1.msra.mxu0 0.0
    %313 = vmatprep.subr.mxu0 0.0
    %314 = vmatpush1.msra.mxu0 0.0
    %315 = vmatprep.subr.mxu0 0.0
    %316 = vmatpush1.msra.mxu0 0.0
    %317 = vmatprep.subr.mxu0 0.0
    %318 = vmatpush1.msra.mxu0 0.0
    %319 = vmatprep.subr.mxu0 0.0
    %320 = vmatpush1.msra.mxu0 0.0
    %321 = vmatprep.subr.mxu0 0.0
    %322 = vmatpush1.msra.mxu0 0.0
    %323 = vmatprep.subr.mxu0 0.0
    %324 = vmatpush1.msra.mxu0 0.0
    %325 = vmatprep.subr.mxu0 0.0
    %326 = vmatpush1.msra.mxu0 0.0
    %327 = vmatprep.subr.mxu0 0.0
    %328 = vmatpush1.msra.mxu0 0.0
    %329 = vmatprep.subr.mxu0 0.0
    %330 = vmatpush1.msra.mxu0 0.0
    %331 = vmatprep.mubr.f32.mxu0 0.0
    %332 = vmatmul.mubr.f32.gmra.mrb[0].mxu0 %v221
    %v333 = vpop.f32.mrb[0].mxu0
    %v334 = vadd.f32 %v260, %v333
    %v335 = vpop.f32.mrb[0].mxu0
    %v336 = vadd.f32 %v264, %v335
    %337 = vmatprep.mubr.f32.mxu0 0.0
    %338 = vmatmul.mubr.f32.gmra.mrb[0].mxu0 %v222
    %v339 = vpop.f32.mrb[0].mxu0
    %v340 = vadd.f32 %v260, %v339
    %v341 = vpop.f32.mrb[0].mxu0
    %v342 = vadd.f32 %v264, %v341
    %343 = vdwg.mxu0
    %v344 = vld [vmem:[#allocation5] sm:$0xff]
    %v345 = vld [vmem:[#allocation5 + $0x8] sm:$0xff]
    %v346 = vmul.f32 %v336, %v344
    %v347 = vmul.f32 %v342, %v345
    %v348 = vadd.f32 %v334, %v346
    %v349 = vadd.f32 %v340, %v347
    %v350 = vlaneseq
    %v351 = vand.u32 %v350, 127
    %v352 = vlaneseq
    %v353 = vshrl.u32 %v352, 7
    %v354 = vadd.s32 %v353, 8
    %s355 = smul.u32 0, 16
    %v356 = vstv %s355
    %v357 = vadd.s32 %v353, %v356
    %v358 = vadd.s32 %v354, %v356
    %vm359 = vcmp.lt.s32.totalorder %v351, 8
    %vm360 = vcmp.lt.s32.totalorder %v357, 16
    %vm361 = vcmp.lt.s32.totalorder %v358, 16
    %vm362 = vmand %vm359, %vm360
    %vm363 = vmand %vm359, %vm361
    %v364 = vmul.f32 %v336, %v336
    %v365 = vmul.f32 %v342, %v342
    %v366 = vsel %vm362, %v364, 1.0
    %v367 = vsel %vm363, %v365, 1.0
    %v368 = vmul.f32 %v334, %v334
    %v369 = vmul.f32 %v340, %v340
    %v370 = vadd.f32 %v364, %v368
    %v371 = vadd.f32 %v365, %v369
    %v372 = vlog2.pop %v366
    %v373 = vmul.f32 %v372, 0.6931472
    %v374 = vlog2.pop %v367
    %v375 = vmul.f32 %v374, 0.6931472
    %v376 = vsub.f32 %v370, %v373
    %v377 = vsub.f32 %v371, %v375
    %v378 = vsub.f32 %v376, 1.0
    %v379 = vsub.f32 %v377, 1.0
    %v380 = vmul.f32 %v378, 0.5
    %v381 = vmul.f32 %v379, 0.5
    %v382 = vsel %vm362, %v380, 0.0
    %v383 = vsel %vm363, %v381, 0.0
    %v384 = vadd.f32 %v382, %v383
    %385 = vadd.xlane.f32.xlu0 %v384
    %v386 = vpop.xlane.xlu0 %385
    %v387 = vrot.slane %v386, 4
    %v388 = vadd.f32 %v386, %v387
    %v389 = vrot.slane %v388, 2
    %v390 = vadd.f32 %v388, %v389
    %v391 = vrot.slane %v390, 1
    %v392 = vadd.f32 %v390, %v391
    %s393 = vtos %v392
    %v394 = vstv %s393
    %395 = vst [vmem:[#allocation14] sm:$0xff] %v394
    %v396 = vld [vmem:[#allocation10] sm:$0xff]
    %v397 = vld [vmem:[#allocation10 + $0x8] sm:$0xff]
    %v398 = vld [vmem:[#allocation10 + $0x10] sm:$0xff]
    %v399 = vld [vmem:[#allocation10 + $0x18] sm:$0xff]
    %v400 = vld [vmem:[#allocation10 + $0x20] sm:$0xff]
    %v401 = vld [vmem:[#allocation10 + $0x28] sm:$0xff]
    %v402 = vld [vmem:[#allocation10 + $0x30] sm:$0xff]
    %v403 = vld [vmem:[#allocation10 + $0x38] sm:$0xff]
    %v404 = vld [vmem:[#allocation10 + $0x40] sm:$0xff]
    %v405 = vld [vmem:[#allocation10 + $0x48] sm:$0xff]
    %v406 = vld [vmem:[#allocation10 + $0x50] sm:$0xff]
    %v407 = vld [vmem:[#allocation10 + $0x58] sm:$0xff]
    %v408 = vld [vmem:[#allocation10 + $0x60] sm:$0xff]
    %v409 = vld [vmem:[#allocation10 + $0x68] sm:$0xff]
    %v410 = vld [vmem:[#allocation10 + $0x70] sm:$0xff]
    %v411 = vld [vmem:[#allocation10 + $0x78] sm:$0xff]
    %v412 = vld [vmem:[%s7] sm:$0x1]
    %v414 = vlaneseq
    %v415 = vshrl.u32 %v414, 7
    %v416 = vsub.s32 0, %v415
    %v417 = vrot.slane %v412, %v416
    %419 = vmatprep.subr.mxu0 0.0
    %420 = vmatpush1.msra.mxu0 %v396
    %421 = vmatprep.subr.mxu0 0.0
    %422 = vmatpush1.msra.mxu0 %v397
    %423 = vmatprep.subr.mxu0 0.0
    %424 = vmatpush1.msra.mxu0 %v398
    %425 = vmatprep.subr.mxu0 0.0
    %426 = vmatpush1.msra.mxu0 %v399
    %427 = vmatprep.subr.mxu0 0.0
    %428 = vmatpush1.msra.mxu0 %v400
    %429 = vmatprep.subr.mxu0 0.0
    %430 = vmatpush1.msra.mxu0 %v401
    %431 = vmatprep.subr.mxu0 0.0
    %432 = vmatpush1.msra.mxu0 %v402
    %433 = vmatprep.subr.mxu0 0.0
    %434 = vmatpush1.msra.mxu0 %v403
    %435 = vmatprep.subr.mxu0 0.0
    %436 = vmatpush1.msra.mxu0 %v404
    %437 = vmatprep.subr.mxu0 0.0
    %438 = vmatpush1.msra.mxu0 %v405
    %439 = vmatprep.subr.mxu0 0.0
    %440 = vmatpush1.msra.mxu0 %v406
    %441 = vmatprep.subr.mxu0 0.0
    %442 = vmatpush1.msra.mxu0 %v407
    %443 = vmatprep.subr.mxu0 0.0
    %444 = vmatpush1.msra.mxu0 %v408
    %445 = vmatprep.subr.mxu0 0.0
    %446 = vmatpush1.msra.mxu0 %v409
    %447 = vmatprep.subr.mxu0 0.0
    %448 = vmatpush1.msra.mxu0 %v410
    %449 = vmatprep.subr.mxu0 0.0
    %450 = vmatpush1.msra.mxu0 %v411
    %451 = vmatprep.subr.mxu0 0.0
    %452 = vmatpush1.msra.mxu0 0.0
    %453 = vmatprep.subr.mxu0 0.0
    %454 = vmatpush1.msra.mxu0 0.0
    %455 = vmatprep.subr.mxu0 0.0
    %456 = vmatpush1.msra.mxu0 0.0
    %457 = vmatprep.subr.mxu0 0.0
    %458 = vmatpush1.msra.mxu0 0.0
    %459 = vmatprep.subr.mxu0 0.0
    %460 = vmatpush1.msra.mxu0 0.0
    %461 = vmatprep.subr.mxu0 0.0
    %462 = vmatpush1.msra.mxu0 0.0
    %463 = vmatprep.subr.mxu0 0.0
    %464 = vmatpush1.msra.mxu0 0.0
    %465 = vmatprep.subr.mxu0 0.0
    %466 = vmatpush1.msra.mxu0 0.0
    %467 = vmatprep.subr.mxu0 0.0
    %468 = vmatpush1.msra.mxu0 0.0
    %469 = vmatprep.subr.mxu0 0.0
    %470 = vmatpush1.msra.mxu0 0.0
    %471 = vmatprep.subr.mxu0 0.0
    %472 = vmatpush1.msra.mxu0 0.0
    %473 = vmatprep.subr.mxu0 0.0
    %474 = vmatpush1.msra.mxu0 0.0
    %475 = vmatprep.subr.mxu0 0.0
    %476 = vmatpush1.msra.mxu0 0.0
    %477 = vmatprep.subr.mxu0 0.0
    %478 = vmatpush1.msra.mxu0 0.0
    %479 = vmatprep.subr.mxu0 0.0
    %480 = vmatpush1.msra.mxu0 0.0
    %481 = vmatprep.subr.mxu0 0.0
    %482 = vmatpush1.msra.mxu0 0.0
    %483 = vmatprep.mubr.f32.mxu0 0.0
    %484 = vmatmul.mubr.f32.gmra.mrb[0].mxu0 %v348
    %v485 = vpop.f32.mrb[0].mxu0
    %v486 = vadd.f32 %v417, %v485
    %v487 = vpop.f32.mrb[0].mxu0
    %488 = vmatprep.mubr.f32.mxu0 0.0
    %489 = vmatmul.mubr.f32.gmra.mrb[0].mxu0 %v349
    %v490 = vpop.f32.mrb[0].mxu0
    %v491 = vadd.f32 %v417, %v490
    %v492 = vpop.f32.mrb[0].mxu0
    %493 = vdwg.mxu0
    %v494 = vmax.f32 %v486, 0.0
    %v495 = vmax.f32 %v491, 0.0
    %v496 = vld [vmem:[#allocation11] sm:$0xff]
    %v497 = vld [vmem:[#allocation11 + $0x8] sm:$0xff]
    %v498 = vld [vmem:[#allocation11 + $0x10] sm:$0xff]
    %v499 = vld [vmem:[#allocation11 + $0x18] sm:$0xff]
    %v500 = vld [vmem:[#allocation11 + $0x20] sm:$0xff]
    %v501 = vld [vmem:[#allocation11 + $0x28] sm:$0xff]
    %v502 = vld [vmem:[#allocation11 + $0x30] sm:$0xff]
    %v503 = vld [vmem:[#allocation11 + $0x38] sm:$0xff]
    %v504 = vld [vmem:[#allocation11 + $0x40] sm:$0xff]
    %v505 = vld [vmem:[#allocation11 + $0x48] sm:$0xff]
    %v506 = vld [vmem:[#allocation11 + $0x50] sm:$0xff]
    %v507 = vld [vmem:[#allocation11 + $0x58] sm:$0xff]
    %v508 = vld [vmem:[#allocation11 + $0x60] sm:$0xff]
    %v509 = vld [vmem:[#allocation11 + $0x68] sm:$0xff]
    %v510 = vld [vmem:[#allocation11 + $0x70] sm:$0xff]
    %v511 = vld [vmem:[#allocation11 + $0x78] sm:$0xff]
    %v512 = vld [vmem:[%s9] sm:$0x1]
    %v514 = vlaneseq
    %v515 = vshrl.u32 %v514, 7
    %v516 = vsub.s32 0, %v515
    %v517 = vrot.slane %v512, %v516
    %519 = vmatprep.subr.mxu0 0.0
    %520 = vmatpush1.msra.mxu0 %v496
    %521 = vmatprep.subr.mxu0 0.0
    %522 = vmatpush1.msra.mxu0 %v497
    %523 = vmatprep.subr.mxu0 0.0
    %524 = vmatpush1.msra.mxu0 %v498
    %525 = vmatprep.subr.mxu0 0.0
    %526 = vmatpush1.msra.mxu0 %v499
    %527 = vmatprep.subr.mxu0 0.0
    %528 = vmatpush1.msra.mxu0 %v500
    %529 = vmatprep.subr.mxu0 0.0
    %530 = vmatpush1.msra.mxu0 %v501
    %531 = vmatprep.subr.mxu0 0.0
    %532 = vmatpush1.msra.mxu0 %v502
    %533 = vmatprep.subr.mxu0 0.0
    %534 = vmatpush1.msra.mxu0 %v503
    %535 = vmatprep.subr.mxu0 0.0
    %536 = vmatpush1.msra.mxu0 %v504
    %537 = vmatprep.subr.mxu0 0.0
    %538 = vmatpush1.msra.mxu0 %v505
    %539 = vmatprep.subr.mxu0 0.0
    %540 = vmatpush1.msra.mxu0 %v506
    %541 = vmatprep.subr.mxu0 0.0
    %542 = vmatpush1.msra.mxu0 %v507
    %543 = vmatprep.subr.mxu0 0.0
    %544 = vmatpush1.msra.mxu0 %v508
    %545 = vmatprep.subr.mxu0 0.0
    %546 = vmatpush1.msra.mxu0 %v509
    %547 = vmatprep.subr.mxu0 0.0
    %548 = vmatpush1.msra.mxu0 %v510
    %549 = vmatprep.subr.mxu0 0.0
    %550 = vmatpush1.msra.mxu0 %v511
    %551 = vmatprep.subr.mxu0 0.0
    %552 = vmatpush1.msra.mxu0 0.0
    %553 = vmatprep.subr.mxu0 0.0
    %554 = vmatpush1.msra.mxu0 0.0
    %555 = vmatprep.subr.mxu0 0.0
    %556 = vmatpush1.msra.mxu0 0.0
    %557 = vmatprep.subr.mxu0 0.0
    %558 = vmatpush1.msra.mxu0 0.0
    %559 = vmatprep.subr.mxu0 0.0
    %560 = vmatpush1.msra.mxu0 0.0
    %561 = vmatprep.subr.mxu0 0.0
    %562 = vmatpush1.msra.mxu0 0.0
    %563 = vmatprep.subr.mxu0 0.0
    %564 = vmatpush1.msra.mxu0 0.0
    %565 = vmatprep.subr.mxu0 0.0
    %566 = vmatpush1.msra.mxu0 0.0
    %567 = vmatprep.subr.mxu0 0.0
    %568 = vmatpush1.msra.mxu0 0.0
    %569 = vmatprep.subr.mxu0 0.0
    %570 = vmatpush1.msra.mxu0 0.0
    %571 = vmatprep.subr.mxu0 0.0
    %572 = vmatpush1.msra.mxu0 0.0
    %573 = vmatprep.subr.mxu0 0.0
    %574 = vmatpush1.msra.mxu0 0.0
    %575 = vmatprep.subr.mxu0 0.0
    %576 = vmatpush1.msra.mxu0 0.0
    %577 = vmatprep.subr.mxu0 0.0
    %578 = vmatpush1.msra.mxu0 0.0
    %579 = vmatprep.subr.mxu0 0.0
    %580 = vmatpush1.msra.mxu0 0.0
    %581 = vmatprep.subr.mxu0 0.0
    %582 = vmatpush1.msra.mxu0 0.0
    %583 = vmatprep.mubr.f32.mxu0 0.0
    %584 = vmatmul.mubr.f32.gmra.mrb[0].mxu0 %v494
    %v585 = vpop.f32.mrb[0].mxu0
    %v586 = vadd.f32 %v517, %v585
    %v587 = vpop.f32.mrb[0].mxu0
    %588 = vmatprep.mubr.f32.mxu0 0.0
    %589 = vmatmul.mubr.f32.gmra.mrb[0].mxu0 %v495
    %v590 = vpop.f32.mrb[0].mxu0
    %v591 = vadd.f32 %v517, %v590
    %v592 = vpop.f32.mrb[0].mxu0
    %593 = vdwg.mxu0
    %594 = vst [vmem:[#allocation13] sm:$0xff] %v586
    %595 = vst [vmem:[#allocation13 + $0x8] sm:$0xff] %v591
    // Predicated region
    $region66: #{tpu_custom_call.1} parent=1 // pred_check
      _
    $region67: #{tpu_custom_call.1} parent=1 // pred_check_branch
      %597 = sbr.rel (0) target = $region69
    $region68: #{tpu_custom_call.1} parent=1 // pred_region
      %s599 = ssub.s32 256, 256
      %600 = vsyncadd [#allocation4], %s599
      %s601 = sshll.u32 [#allocation13], 4
      %s602 = int_to_ptr.vmem [resolvable:$true] %s601
      %607 = dma.vmem_to_hbm [thread:$0]  %s602, 256, %s10, [#allocation4], 128, 128, 8
    $region69: #{tpu_custom_call.1} parent=1 // pred_fallthru
      _
    // Predicated region
    $region70: #{tpu_custom_call.1} parent=1 // pred_check
      _
    $region71: #{tpu_custom_call.1} parent=1 // pred_check_branch
      %609 = sbr.rel (0) target = $region73
    $region72: #{tpu_custom_call.1} parent=1 // pred_region
      %s611 = ssub.s32 128, 128
      %612 = vsyncadd [#allocation15], %s611
      %s614 = sshll.u32 [#allocation14], 4
      %s615 = int_to_ptr.vmem [resolvable:$true] %s614
      %617 = dma.vmem_to_hbm [thread:$0]  %s615, 128, %s11, [#allocation15]
    $region73: #{tpu_custom_call.1} parent=1 // pred_fallthru
      _
    // Predicated region
    $region74: #{tpu_custom_call.1} parent=1 // pred_check
      _
    $region75: #{tpu_custom_call.1} parent=1 // pred_check_branch
      %619 = sbr.rel (0) target = $region77
    $region76: #{tpu_custom_call.1} parent=1 // pred_region
      %620 = dma.done [#allocation4], 256
    $region77: #{tpu_custom_call.1} parent=1 // pred_fallthru
      _
    // Predicated region
    $region78: #{tpu_custom_call.1} parent=1 // pred_check
      _
    $region79: #{tpu_custom_call.1} parent=1 // pred_check_branch
      %622 = sbr.rel (0) target = $region81
    $region80: #{tpu_custom_call.1} parent=1 // pred_region
      %623 = dma.done [#allocation15], 128
    $region81: #{tpu_custom_call.1} parent=1 // pred_fallthru
      _
    %624 = vsyncpa [#allocation3], 1
    %625 = vsyncpa [#allocation6], 1
    %626 = vsyncpa [#allocation9], 1
    %627 = vsyncpa [#allocation12], 1
    %628 = vsyncpa [#allocation4], 1
    %629 = vsyncpa [#allocation15], 1

</llo_original>
